<compile_context>
chip_gen: v7x
topology: tpu7x:2x2x1
jax: 0.10.0
libtpu: 0.0.40
codegen_flags: <defaults>
</compile_context>

<pallas_src>
import jax
import jax.numpy as jnp
from jax.experimental import pallas as pl
from jax.experimental.pallas import tpu as pltpu


_TINY_BYPASS_BYTES = 32 * 1024          # per array: below this, plain XLA add
_SPLIT_THRESHOLD_BYTES = 512 * 1024     # per array: above this, force >=2 blocks (v7x 2 TCs)
_TARGET_BLOCK_BYTES = 2 * 1024 * 1024   # per array per grid step (~16 MiB VMEM total)
_VMEM_LIMIT_BYTES = 48 * 1024 * 1024    # safe on v5e/v6e (128 MiB) and v7x (64 MiB)


def _add3_kernel(l_ref, a_ref, v_ref, o_ref):
    # Pure VPU elementwise; dtype promotion rides free slots (kernel is DMA-bound).
    acc_dtype = o_ref.dtype
    o_ref[...] = (
        l_ref[...].astype(acc_dtype)
        + a_ref[...].astype(acc_dtype)
        + v_ref[...].astype(acc_dtype)
    )


def _pick_layout(total_aligned, out_itemsize, min_itemsize):
    """Lane-dense [rows, lanes] layout + row tiling for a 128-aligned element count.

    Returns (lanes, rows, tile_rows, grid_rows).
    """
    # Largest lane width in {1024, 512, 256, 128} dividing the element count
    # -> all stores are unmasked, lane-dense vst.
    for lanes in (1024, 512, 256, 128):
        if total_aligned % lanes == 0:
            break
    rows = total_aligned // lanes

    # Sublane packing: 8 rows for 32-bit, 16 for 16-bit, 32 for 8-bit dtypes.
    sublane = max(8, 32 // max(1, min_itemsize))

    bytes_per_array = total_aligned * out_itemsize
    if bytes_per_array <= _SPLIT_THRESHOLD_BYTES or rows <= sublane:
        # Small/medium input: one full-extent block, no per-step overhead.
        return lanes, rows, rows, 1

    # Large input: ~2 MiB blocks, sublane-aligned.
    target_rows = max(
        sublane, (_TARGET_BLOCK_BYTES // (lanes * out_itemsize)) // sublane * sublane
    )
    # Force at least 2 grid steps so the "parallel" axis can shard across
    # v7x's 2 TensorCores (no effect on v5e/v6e).
    half_rows = -(-rows // 2)
    half_rows = -(-half_rows // sublane) * sublane
    tile_rows = max(sublane, min(target_rows, half_rows))
    grid_rows = -(-rows // tile_rows)
    return lanes, rows, tile_rows, grid_rows


def mim_forward(l, a, v, *, force_pallas=False):
    """Pallas implementation of MIM.forward: elementwise l + a + v."""
    assert l.shape == a.shape == v.shape, "MIM.forward expects same-shaped inputs"
    orig_shape = l.shape
    out_dtype = jnp.result_type(l.dtype, a.dtype, v.dtype)
    out_itemsize = jnp.dtype(out_dtype).itemsize
    min_itemsize = min(jnp.dtype(x.dtype).itemsize for x in (l, a, v))

    total = l.size
    # Tiny inputs: Pallas launch + layout plumbing dominates; let XLA fuse it.
    if (total * out_itemsize <= _TINY_BYPASS_BYTES or total < 128) and not force_pallas:
        out = l.astype(out_dtype) + a.astype(out_dtype) + v.astype(out_dtype)
        return out.reshape(orig_shape)

    lf = l.reshape(-1)
    af = a.reshape(-1)
    vf = v.reshape(-1)

    main = (total // 128) * 128
    tail = total - main
    if main == 0:
        out = lf.astype(out_dtype) + af.astype(out_dtype) + vf.astype(out_dtype)
        return out.reshape(orig_shape)

    lanes, rows, tile_rows, grid_rows = _pick_layout(main, out_itemsize, min_itemsize)

    def slab(x):
        xm = x[:main] if tail else x
        return xm.reshape(rows, lanes)

    spec = pl.BlockSpec((tile_rows, lanes), lambda i: (i, 0))

    out2 = pl.pallas_call(
        _add3_kernel,
        out_shape=jax.ShapeDtypeStruct((rows, lanes), out_dtype),
        grid=(grid_rows,),
        in_specs=[spec, spec, spec],
        out_specs=spec,
        compiler_params=pltpu.CompilerParams(
            dimension_semantics=("parallel",),
            vmem_limit_bytes=_VMEM_LIMIT_BYTES,
        ),
    )(slab(lf), slab(af), slab(vf))

    out_flat = out2.reshape(-1)
    if tail:
        tail_out = (
            lf[main:].astype(out_dtype)
            + af[main:].astype(out_dtype)
            + vf[main:].astype(out_dtype)
        )
        out_flat = jnp.concatenate([out_flat, tail_out])
    return out_flat.reshape(orig_shape)


if __name__ == "__main__":
    key = jax.random.PRNGKey(0)
    k_l, k_a, k_v = jax.random.split(key, 3)

    # 1) Small NCHW-like shape (128-aligned element count) -> single full-extent
    #    block Pallas path; force_pallas so the kernel is actually exercised.
    shape = (2, 4, 16, 16)
    l = jax.random.normal(k_l, shape, dtype=jnp.float32)
    a = jax.random.normal(k_a, shape, dtype=jnp.float32)
    v = jax.random.normal(k_v, shape, dtype=jnp.float32)

    out = mim_forward(l, a, v, force_pallas=True)
    jax.block_until_ready(out)
    ref = l + a + v
    assert out.shape == shape
    assert out.dtype == ref.dtype
    assert jnp.allclose(out, ref, atol=1e-6), "mismatch vs reference (aligned path)"

    # 2) Non-128-multiple element count + mixed dtypes -> aligned-prefix Pallas
    #    kernel with in-kernel promotion + XLA tail add.
    shape2 = (2, 49, 45)  # 4410 elements
    l2 = jax.random.normal(k_l, shape2, dtype=jnp.float32)
    a2 = jax.random.normal(k_a, shape2, dtype=jnp.float32)
    v2 = jax.random.normal(k_v, shape2, dtype=jnp.bfloat16)

    out2 = mim_forward(l2, a2, v2, force_pallas=True)
    jax.block_until_ready(out2)
    ref2 = l2 + a2 + v2.astype(jnp.float32)
    assert out2.shape == shape2
    assert out2.dtype == jnp.float32
    assert jnp.allclose(out2, ref2, atol=1e-6), "mismatch vs reference (tail/mixed path)"

    # 3) Default dispatch (tiny input -> fused XLA add fast path).
    out3 = mim_forward(l, a, v)
    jax.block_until_ready(out3)
    assert jnp.allclose(out3, ref, atol=1e-6), "mismatch vs reference (tiny bypass)"

    print("KERNEL_OK")
</pallas_src>

<mosaic_0001>
module attributes {stable_mosaic.version = 11 : i64} {
  func.func @_add3_kernel(%arg0: i32, %arg1: memref<2x1024xf32, #tpu.memory_space<vmem>>, %arg2: memref<2x1024xf32, #tpu.memory_space<vmem>>, %arg3: memref<2x1024xf32, #tpu.memory_space<vmem>>, %arg4: memref<2x1024xf32, #tpu.memory_space<vmem>>) attributes {dimension_semantics = [#tpu.dimension_semantics<parallel>], iteration_bounds = array<i64: 1>, scalar_prefetch = 0 : i64, scratch_operands = 0 : i64, tpu.core_type = #tpu.core_type<tc>, window_params = [{transform_indices = @transform_0, window_bounds = array<i64: 2, 1024>}, {transform_indices = @transform_1, window_bounds = array<i64: 2, 1024>}, {transform_indices = @transform_2, window_bounds = array<i64: 2, 1024>}, {transform_indices = @transform_3, window_bounds = array<i64: 2, 1024>}]} {
    %c0 = arith.constant 0 : index
    %c0_0 = arith.constant 0 : index
    %0 = vector.load %arg1[%c0, %c0_0] : memref<2x1024xf32, #tpu.memory_space<vmem>>, vector<2x1024xf32>
    %c0_1 = arith.constant 0 : index
    %c0_2 = arith.constant 0 : index
    %1 = vector.load %arg2[%c0_1, %c0_2] : memref<2x1024xf32, #tpu.memory_space<vmem>>, vector<2x1024xf32>
    %2 = arith.addf %0, %1 : vector<2x1024xf32>
    %c0_3 = arith.constant 0 : index
    %c0_4 = arith.constant 0 : index
    %3 = vector.load %arg3[%c0_3, %c0_4] : memref<2x1024xf32, #tpu.memory_space<vmem>>, vector<2x1024xf32>
    %4 = arith.addf %2, %3 : vector<2x1024xf32>
    %c0_5 = arith.constant 0 : index
    %c0_6 = arith.constant 0 : index
    %5 = vector.load %arg4[%c0_5, %c0_6] : memref<2x1024xf32, #tpu.memory_space<vmem>>, vector<2x1024xf32>
    tpu.vector_store %arg4[%c0_5, %c0_6], %4 {strides = array<i32>} : memref<2x1024xf32, #tpu.memory_space<vmem>>, vector<2x1024xf32>,
    return
  }
  func.func @transform_0(%arg0: i32) -> (i32, i32) {
    %c0_i32 = arith.constant 0 : i32
    %c0_i32_0 = arith.constant 0 : i32
    return %arg0, %c0_i32 : i32, i32
  }
  func.func @transform_1(%arg0: i32) -> (i32, i32) {
    %c0_i32 = arith.constant 0 : i32
    %c0_i32_0 = arith.constant 0 : i32
    return %arg0, %c0_i32 : i32, i32
  }
  func.func @transform_2(%arg0: i32) -> (i32, i32) {
    %c0_i32 = arith.constant 0 : i32
    %c0_i32_0 = arith.constant 0 : i32
    return %arg0, %c0_i32 : i32, i32
  }
  func.func @transform_3(%arg0: i32) -> (i32, i32) {
    %c0_i32 = arith.constant 0 : i32
    %c0_i32_0 = arith.constant 0 : i32
    return %arg0, %c0_i32 : i32, i32
  }
}

</mosaic_0001>

<llo_original>
// kernel: tpu_custom_call.1
$region0: #{tpu_custom_call.1}
  #allocation0 [shape = 'u32[]', space=smem, size = 0x4, offset = 0x4, fixed_abs, tag = 'smem constant byte address 0x4 - core index']
  #allocation1 [shape = 'u32[144,128]{1,0:T(1,128)}', space=vmem, size = 0x12000, scoped, tag = 'internal scratch']
  %s0 = inlined_call_operand.hbm [shape: f32[2,1024], index: 0, kind: input, shape index: {}]
  %s1 = inlined_call_operand.hbm [shape: f32[2,1024], index: 1, kind: input, shape index: {}]
  %s2 = inlined_call_operand.hbm [shape: f32[2,1024], index: 2, kind: input, shape index: {}]
  %s3 = inlined_call_operand.hbm [shape: f32[2,1024], index: 3, kind: output, shape index: {}]
  %s4 = sld [smem:[#allocation0]]
  $region34: #{tpu_custom_call.1} parent=0
    _
  %s6 = ssub.s32 1, %s4
  %s7 = scalar_select 0, %s6, %s4
  $region1: #{tpu_custom_call.1} parent=0
    #allocation2 [shape = 'u8[8192]{0}', space=vmem, size = 0x2000, scoped, tag = 'input window, operand 0, single buffered']
    #allocation3 [shape = 's32[1]{0}', space=sflag, size = 0x4, scoped, tag = 'scoped memory for tpu_custom_call.1']
    #allocation4 [shape = 's32[1]{0}', space=sflag, size = 0x4, scoped, tag = 'scoped memory for tpu_custom_call.1']
    #allocation5 [shape = 'u8[8192]{0}', space=vmem, size = 0x2000, scoped, tag = 'input window, operand 1, single buffered']
    #allocation6 [shape = 's32[1]{0}', space=sflag, size = 0x4, scoped, tag = 'scoped memory for tpu_custom_call.1']
    #allocation7 [shape = 'u8[8192]{0}', space=vmem, size = 0x2000, scoped, tag = 'input window, operand 2, single buffered']
    #allocation8 [shape = 'u8[8192]{0}', space=vmem, size = 0x2000, scoped, tag = 'output window, operand 0, single buffered']
    %8 = vsyncpa [#allocation3], 0
    %9 = vsyncpa [#allocation6], 0
    %10 = vsyncpa [#allocation4], 0
    // Predicated region
    $region2: #{tpu_custom_call.1} parent=1 // pred_check
      _
    $region3: #{tpu_custom_call.1} parent=1 // pred_check_branch
      %12 = sbr.rel (0) target = $region5
    $region4: #{tpu_custom_call.1} parent=1 // pred_region
      %s14 = ssub.s32 256, 256
      %15 = vsyncadd [#allocation3], %s14
      %s17 = sshll.u32 [#allocation2], 4
      %s18 = int_to_ptr.vmem [resolvable:$true] %s17
      %20 = dma.hbm_to_vmem [thread:$0]  %s0, 256, %s18, [#allocation3]
    $region5: #{tpu_custom_call.1} parent=1 // pred_fallthru
      _
    // Predicated region
    $region6: #{tpu_custom_call.1} parent=1 // pred_check
      _
    $region7: #{tpu_custom_call.1} parent=1 // pred_check_branch
      %22 = sbr.rel (0) target = $region9
    $region8: #{tpu_custom_call.1} parent=1 // pred_region
      %s24 = ssub.s32 256, 256
      %25 = vsyncadd [#allocation6], %s24
      %s27 = sshll.u32 [#allocation5], 4
      %s28 = int_to_ptr.vmem [resolvable:$true] %s27
      %30 = dma.hbm_to_vmem [thread:$0]  %s1, 256, %s28, [#allocation6]
    $region9: #{tpu_custom_call.1} parent=1 // pred_fallthru
      _
    // Predicated region
    $region10: #{tpu_custom_call.1} parent=1 // pred_check
      _
    $region11: #{tpu_custom_call.1} parent=1 // pred_check_branch
      %32 = sbr.rel (0) target = $region13
    $region12: #{tpu_custom_call.1} parent=1 // pred_region
      %s34 = ssub.s32 256, 256
      %35 = vsyncadd [#allocation6], %s34
      %s37 = sshll.u32 [#allocation7], 4
      %s38 = int_to_ptr.vmem [resolvable:$true] %s37
      %40 = dma.hbm_to_vmem [thread:$0]  %s2, 256, %s38, [#allocation6]
    $region13: #{tpu_custom_call.1} parent=1 // pred_fallthru
      _
    // Predicated region
    $region14: #{tpu_custom_call.1} parent=1 // pred_check
      _
    $region15: #{tpu_custom_call.1} parent=1 // pred_check_branch
      %42 = sbr.rel (0) target = $region17
    $region16: #{tpu_custom_call.1} parent=1 // pred_region
      %43 = dma.done [#allocation3], 256
    $region17: #{tpu_custom_call.1} parent=1 // pred_fallthru
      _
    // Predicated region
    $region18: #{tpu_custom_call.1} parent=1 // pred_check
      _
    $region19: #{tpu_custom_call.1} parent=1 // pred_check_branch
      %45 = sbr.rel (0) target = $region21
    $region20: #{tpu_custom_call.1} parent=1 // pred_region
      %46 = dma.done [#allocation6], 256
    $region21: #{tpu_custom_call.1} parent=1 // pred_fallthru
      _
    // Predicated region
    $region22: #{tpu_custom_call.1} parent=1 // pred_check
      _
    $region23: #{tpu_custom_call.1} parent=1 // pred_check_branch
      %48 = sbr.rel (0) target = $region25
    $region24: #{tpu_custom_call.1} parent=1 // pred_region
      %49 = dma.done [#allocation6], 256
    $region25: #{tpu_custom_call.1} parent=1 // pred_fallthru
      _
    %v50 = vld [vmem:[#allocation2] sm:$0xff]
    %v51 = vld [vmem:[#allocation2 + $0x8] sm:$0xff]
    %v52 = vld [vmem:[#allocation5] sm:$0xff]
    %v53 = vld [vmem:[#allocation5 + $0x8] sm:$0xff]
    %v54 = vadd.f32 %v50, %v52
    %v55 = vadd.f32 %v51, %v53
    %v56 = vld [vmem:[#allocation7] sm:$0xff]
    %v57 = vld [vmem:[#allocation7 + $0x8] sm:$0xff]
    %v58 = vadd.f32 %v54, %v56
    %v59 = vadd.f32 %v55, %v57
    %60 = vst [vmem:[#allocation8] sm:$0xff] %v58
    %61 = vst [vmem:[#allocation8 + $0x8] sm:$0xff] %v59
    // Predicated region
    $region26: #{tpu_custom_call.1} parent=1 // pred_check
      _
    $region27: #{tpu_custom_call.1} parent=1 // pred_check_branch
      %63 = sbr.rel (0) target = $region29
    $region28: #{tpu_custom_call.1} parent=1 // pred_region
      %s65 = ssub.s32 256, 256
      %66 = vsyncadd [#allocation4], %s65
      %s68 = sshll.u32 [#allocation8], 4
      %s69 = int_to_ptr.vmem [resolvable:$true] %s68
      %71 = dma.vmem_to_hbm [thread:$0]  %s69, 256, %s3, [#allocation4]
    $region29: #{tpu_custom_call.1} parent=1 // pred_fallthru
      _
    // Predicated region
    $region30: #{tpu_custom_call.1} parent=1 // pred_check
      _
    $region31: #{tpu_custom_call.1} parent=1 // pred_check_branch
      %73 = sbr.rel (0) target = $region33
    $region32: #{tpu_custom_call.1} parent=1 // pred_region
      %74 = dma.done [#allocation4], 256
    $region33: #{tpu_custom_call.1} parent=1 // pred_fallthru
      _
    %75 = vsyncpa [#allocation3], 1
    %76 = vsyncpa [#allocation6], 1
    %77 = vsyncpa [#allocation4], 1

</llo_original>
